<compile_context>
chip_gen: v6e
topology: v6e:2x2x1
jax: 0.10.0
libtpu: 0.0.40
codegen_flags: <defaults>
</compile_context>

<pallas_src>
import functools
import math

import jax
import jax.numpy as jnp
from jax.experimental import pallas as pl
from jax.experimental.pallas import tpu as pltpu

_LANE = 128
_SUBLANE = 8


def _phce_partial_kernel(logits_ref, labels_ref, flag_ref, out_ref, *, log_t):
    # logits_ref: (TN, Cpad) in the input dtype; upcast here (keeps HBM bytes low for bf16)
    x = logits_ref[...].astype(jnp.float32)            # (TN, Cpad)
    labels = labels_ref[...]                            # (TN, 1) int32
    flag = flag_ref[...]                                 # (TN, 1) int32: 1=active, 0=static, -1=pad

    # --- log-sum-exp / log-space NLL (no probs = e/s, no f32 one-hot) ---
    m = jnp.max(x, axis=-1, keepdims=True)               # (TN, 1)
    s = jnp.sum(jnp.exp(x - m), axis=-1, keepdims=True)  # (TN, 1)
    col = jax.lax.broadcasted_iota(jnp.int32, x.shape, 1)
    x_lab = jnp.sum(jnp.where(col == labels, x, 0.0), axis=-1, keepdims=True)  # (TN, 1)
    nll = m + jnp.log(s) - x_lab                          # (TN, 1), finite for finite logits

    active = flag == 1
    static = flag == 0                                    # padded rows (flag == -1) hit neither

    a_sum = jnp.sum(jnp.where(active, nll, 0.0), keepdims=True)      # (1, 1)
    # p <= 1/t  <=>  nll >= log(t)  -> contributes 0; otherwise contributes nll
    st_val = jnp.where(nll >= log_t, 0.0, nll)
    s_sum = jnp.sum(jnp.where(static, st_val, 0.0), keepdims=True)   # (1, 1)

    # lane-dense per-block output row: lane 0 = a_sum, lane 1 = s_sum, rest 0
    lane = jax.lax.broadcasted_iota(jnp.int32, out_ref.shape, 1)     # (1, 128)
    out_ref[...] = jnp.where(lane == 0, a_sum,
                             jnp.where(lane == 1, s_sum, 0.0)).astype(jnp.float32)


def phce_cross_entropy_loss(logits, labels, weight, t=1.67, block_rows=256):
    """Pallas implementation of CustomPhceCrossEntropyLoss.forward.

    logits: (N, C) float
    labels: (N,)   int
    weight: (N,)   float (fixed at module construction)
    """
    if not jnp.issubdtype(logits.dtype, jnp.floating):
        logits = logits.astype(jnp.float32)
    N, C = logits.shape
    log_t = math.log(float(t))

    # Counts depend only on `weight` (module constant): compute once in the wrapper.
    active = weight != 0
    a_cnt = jnp.sum(active.astype(jnp.float32))
    s_cnt = jnp.sum((~active).astype(jnp.float32))

    # --- lane-align the class axis (pad with the dtype's most-negative value) ---
    Cpad = ((C + _LANE - 1) // _LANE) * _LANE
    if Cpad != C:
        pad_val = jnp.finfo(logits.dtype).min
        logits = jnp.pad(logits, ((0, 0), (0, Cpad - C)), constant_values=pad_val)

    # --- row tiling (TN multiple of 8; pad N up to a whole number of blocks) ---
    TN = min(int(block_rows), ((N + _SUBLANE - 1) // _SUBLANE) * _SUBLANE)
    TN = max(_SUBLANE, ((TN + _SUBLANE - 1) // _SUBLANE) * _SUBLANE)
    nb = pl.cdiv(N, TN)
    Npad = nb * TN

    flag = jnp.where(active, 1, 0).astype(jnp.int32)         # (N,)
    labels_i32 = labels.astype(jnp.int32)
    if Npad != N:
        logits = jnp.pad(logits, ((0, Npad - N), (0, 0)), constant_values=0.0)
        labels_i32 = jnp.pad(labels_i32, (0, Npad - N), constant_values=0)
        flag = jnp.pad(flag, (0, Npad - N), constant_values=-1)   # padded rows: neither set

    labels2d = labels_i32.reshape(Npad, 1)
    flag2d = flag.reshape(Npad, 1)

    itemsize = jnp.dtype(logits.dtype).itemsize
    # Double-buffered input blocks + in-kernel f32 temporaries, with headroom.
    vmem_needed = 2 * TN * Cpad * itemsize + 4 * TN * Cpad * 4
    vmem_limit = int(min(100 << 20, max(32 << 20, int(vmem_needed * 1.5))))

    cost = pl.CostEstimate(
        flops=6 * Npad * Cpad,
        transcendentals=Npad * Cpad + Npad,
        bytes_accessed=Npad * Cpad * itemsize + Npad * 8 + nb * _LANE * 4,
    )

    grid_spec = pltpu.PrefetchScalarGridSpec(
        num_scalar_prefetch=0,
        grid=(nb,),
        in_specs=[
            pl.BlockSpec((TN, Cpad), lambda i: (i, 0)),
            pl.BlockSpec((TN, 1), lambda i: (i, 0)),
            pl.BlockSpec((TN, 1), lambda i: (i, 0)),
        ],
        out_specs=pl.BlockSpec((1, _LANE), lambda i: (i, 0)),
    )

    partials = pl.pallas_call(
        functools.partial(_phce_partial_kernel, log_t=log_t),
        out_shape=jax.ShapeDtypeStruct((nb, _LANE), jnp.float32),
        grid_spec=grid_spec,
        compiler_params=pltpu.CompilerParams(
            dimension_semantics=("parallel",),
            vmem_limit_bytes=vmem_limit,
        ),
        cost_estimate=cost,
    )(logits, labels2d, flag2d)

    a_sum = jnp.sum(partials[:, 0])
    s_sum = jnp.sum(partials[:, 1])
    a_loss = jnp.where(a_cnt > 0, a_sum / jnp.maximum(a_cnt, 1.0), 0.0)
    s_loss = jnp.where(s_cnt > 0, s_sum / jnp.maximum(s_cnt, 1.0), 0.0)
    return a_loss + s_loss


def _reference(logits, labels, weight, t=1.67):
    # Plain-JAX reference mirroring the PyTorch forward.
    threshold = 1.0 / t
    probs = jax.nn.softmax(logits.astype(jnp.float32), axis=1)
    p = probs[jnp.arange(logits.shape[0]), labels]
    nll = -jnp.log(p)
    active = weight != 0
    st = ~active
    a_cnt = jnp.sum(active)
    s_cnt = jnp.sum(st)
    a_loss = jnp.where(a_cnt > 0,
                       jnp.sum(jnp.where(active, nll, 0.0)) / jnp.maximum(a_cnt, 1),
                       0.0)
    st_vals = jnp.where(p <= threshold, 0.0, nll)
    s_loss = jnp.where(s_cnt > 0,
                       jnp.sum(jnp.where(st, st_vals, 0.0)) / jnp.maximum(s_cnt, 1),
                       0.0)
    return a_loss + s_loss


if __name__ == "__main__":
    t = 1.67
    key = jax.random.PRNGKey(0)

    # --- test 1: single block, lane padding (C = 32 -> 128) ---
    N, C = 8, 32
    k1, k2, key = jax.random.split(key, 3)
    logits = jax.random.normal(k1, (N, C), dtype=jnp.float32)
    labels = jax.random.randint(k2, (N,), 0, C, dtype=jnp.int32)
    weight = jnp.array([1.0, 0.0, 1.0, 1.0, 0.0, 1.0, 0.0, 1.0], dtype=jnp.float32)

    loss = jax.block_until_ready(phce_cross_entropy_loss(logits, labels, weight, t=t))
    ref = _reference(logits, labels, weight, t=t)
    assert jnp.allclose(loss, ref, rtol=1e-5, atol=1e-5), (loss, ref)

    # --- test 2: multiple row blocks + row padding + lane padding ---
    N2, C2 = 20, 200
    k3, k4, k5, key = jax.random.split(key, 4)
    logits2 = jax.random.normal(k3, (N2, C2), dtype=jnp.float32)
    labels2 = jax.random.randint(k4, (N2,), 0, C2, dtype=jnp.int32)
    weight2 = (jax.random.uniform(k5, (N2,)) > 0.5).astype(jnp.float32)

    loss2 = jax.block_until_ready(
        phce_cross_entropy_loss(logits2, labels2, weight2, t=t, block_rows=8))
    ref2 = _reference(logits2, labels2, weight2, t=t)
    assert jnp.allclose(loss2, ref2, rtol=1e-5, atol=1e-5), (loss2, ref2)

    print("KERNEL_OK")
</pallas_src>

<mosaic_0001>
module attributes {stable_mosaic.version = 11 : i64} {
  func.func @_phce_partial_kernel(%arg0: i32, %arg1: memref<8x128xf32, #tpu.memory_space<vmem>>, %arg2: memref<8x1xi32, #tpu.memory_space<vmem>>, %arg3: memref<8x1xi32, #tpu.memory_space<vmem>>, %arg4: memref<1x128xf32, #tpu.memory_space<vmem>>) attributes {dimension_semantics = [#tpu.dimension_semantics<parallel>], iteration_bounds = array<i64: 1>, scalar_prefetch = 0 : i64, scratch_operands = 0 : i64, tpu.core_type = #tpu.core_type<tc>, window_params = [{transform_indices = @transform_0, window_bounds = array<i64: 8, 128>}, {transform_indices = @transform_1, window_bounds = array<i64: 8, 1>}, {transform_indices = @transform_2, window_bounds = array<i64: 8, 1>}, {transform_indices = @transform_3, window_bounds = array<i64: 1, 128>}]} {
    %c0 = arith.constant 0 : index
    %c0_0 = arith.constant 0 : index
    %0 = vector.load %arg1[%c0, %c0_0] : memref<8x128xf32, #tpu.memory_space<vmem>>, vector<8x128xf32>
    %c0_1 = arith.constant 0 : index
    %c0_2 = arith.constant 0 : index
    %1 = vector.load %arg2[%c0_1, %c0_2] : memref<8x1xi32, #tpu.memory_space<vmem>>, vector<8x1xi32>
    %c0_3 = arith.constant 0 : index
    %c0_4 = arith.constant 0 : index
    %2 = vector.load %arg3[%c0_3, %c0_4] : memref<8x1xi32, #tpu.memory_space<vmem>>, vector<8x1xi32>
    %cst = arith.constant dense<0xFF800000> : vector<8xf32>
    %3 = vector.multi_reduction <maximumf>, %0, %cst [1] : vector<8x128xf32> to vector<8xf32>
    %4 = vector.shape_cast %3 : vector<8xf32> to vector<8x1xf32>
    %5 = vector.broadcast %4 : vector<8x1xf32> to vector<8x128xf32>
    %6 = arith.subf %0, %5 : vector<8x128xf32>
    %7 = math.exp %6 : vector<8x128xf32>
    %cst_5 = arith.constant dense<0.000000e+00> : vector<8xf32>
    %8 = vector.multi_reduction <add>, %7, %cst_5 [1] : vector<8x128xf32> to vector<8xf32>
    %9 = vector.shape_cast %8 : vector<8xf32> to vector<8x1xf32>
    %10 = tpu.iota {dimensions = array<i32: 1>} : vector<8x128xi32>
    %11 = vector.broadcast %1 : vector<8x1xi32> to vector<8x128xi32>
    %12 = arith.cmpi eq, %10, %11 : vector<8x128xi32>
    %cst_6 = arith.constant 0.000000e+00 : f32
    %13 = vector.broadcast %cst_6 : f32 to vector<8x128xf32>
    %14 = arith.select %12, %0, %13 : vector<8x128xi1>, vector<8x128xf32>
    %cst_7 = arith.constant dense<0.000000e+00> : vector<8xf32>
    %15 = vector.multi_reduction <add>, %14, %cst_7 [1] : vector<8x128xf32> to vector<8xf32>
    %16 = vector.shape_cast %15 : vector<8xf32> to vector<8x1xf32>
    %17 = math.log %9 : vector<8x1xf32>
    %18 = arith.addf %4, %17 : vector<8x1xf32>
    %19 = arith.subf %18, %16 : vector<8x1xf32>
    %c1_i32 = arith.constant 1 : i32
    %20 = vector.broadcast %c1_i32 : i32 to vector<8x1xi32>
    %21 = arith.cmpi eq, %2, %20 : vector<8x1xi32>
    %c0_i32 = arith.constant 0 : i32
    %22 = vector.broadcast %c0_i32 : i32 to vector<8x1xi32>
    %23 = arith.cmpi eq, %2, %22 : vector<8x1xi32>
    %cst_8 = arith.constant 0.000000e+00 : f32
    %24 = vector.broadcast %cst_8 : f32 to vector<8x1xf32>
    %25 = arith.select %21, %19, %24 : vector<8x1xi1>, vector<8x1xf32>
    %26 = vector.shape_cast %25 : vector<8x1xf32> to vector<1x8x1xf32>
    %cst_9 = arith.constant dense<0.000000e+00> : vector<1xf32>
    %27 = vector.multi_reduction <add>, %26, %cst_9 [1, 2] : vector<1x8x1xf32> to vector<1xf32>
    %28 = vector.shape_cast %27 : vector<1xf32> to vector<1x1x1xf32>
    %29 = vector.extract %28[0, 0, 0] : f32 from vector<1x1x1xf32>
    %30 = vector.broadcast %29 : f32 to vector<1x1xf32>
    %cst_10 = arith.constant 0.512823641 : f32
    %31 = vector.broadcast %cst_10 : f32 to vector<8x1xf32>
    %32 = arith.cmpf oge, %19, %31 : vector<8x1xf32>
    %cst_11 = arith.constant 0.000000e+00 : f32
    %33 = vector.broadcast %cst_11 : f32 to vector<8x1xf32>
    %34 = arith.select %32, %33, %19 : vector<8x1xi1>, vector<8x1xf32>
    %cst_12 = arith.constant 0.000000e+00 : f32
    %35 = vector.broadcast %cst_12 : f32 to vector<8x1xf32>
    %36 = arith.select %23, %34, %35 : vector<8x1xi1>, vector<8x1xf32>
    %37 = vector.shape_cast %36 : vector<8x1xf32> to vector<1x8x1xf32>
    %cst_13 = arith.constant dense<0.000000e+00> : vector<1xf32>
    %38 = vector.multi_reduction <add>, %37, %cst_13 [1, 2] : vector<1x8x1xf32> to vector<1xf32>
    %39 = vector.shape_cast %38 : vector<1xf32> to vector<1x1x1xf32>
    %40 = vector.extract %39[0, 0, 0] : f32 from vector<1x1x1xf32>
    %41 = vector.broadcast %40 : f32 to vector<1x1xf32>
    %42 = tpu.iota {dimensions = array<i32: 1>} : vector<1x128xi32>
    %c0_i32_14 = arith.constant 0 : i32
    %43 = vector.broadcast %c0_i32_14 : i32 to vector<1x128xi32>
    %44 = arith.cmpi eq, %42, %43 : vector<1x128xi32>
    %c1_i32_15 = arith.constant 1 : i32
    %45 = vector.broadcast %c1_i32_15 : i32 to vector<1x128xi32>
    %46 = arith.cmpi eq, %42, %45 : vector<1x128xi32>
    %cst_16 = arith.constant 0.000000e+00 : f32
    %47 = vector.shape_cast %41 : vector<1x1xf32> to vector<1x1xf32>
    %48 = vector.broadcast %47 : vector<1x1xf32> to vector<1x128xf32>
    %49 = vector.broadcast %cst_16 : f32 to vector<1x128xf32>
    %50 = arith.select %46, %48, %49 : vector<1x128xi1>, vector<1x128xf32>
    %51 = vector.shape_cast %30 : vector<1x1xf32> to vector<1x1xf32>
    %52 = vector.broadcast %51 : vector<1x1xf32> to vector<1x128xf32>
    %53 = arith.select %44, %52, %50 : vector<1x128xi1>, vector<1x128xf32>
    %c0_17 = arith.constant 0 : index
    %c0_18 = arith.constant 0 : index
    %54 = vector.load %arg4[%c0_17, %c0_18] : memref<1x128xf32, #tpu.memory_space<vmem>>, vector<1x128xf32>
    tpu.vector_store %arg4[%c0_17, %c0_18], %53 {strides = array<i32>} : memref<1x128xf32, #tpu.memory_space<vmem>>, vector<1x128xf32>,
    return
  }
  func.func @transform_0(%arg0: i32) -> (i32, i32) {
    %c0_i32 = arith.constant 0 : i32
    %c0_i32_0 = arith.constant 0 : i32
    return %arg0, %c0_i32 : i32, i32
  }
  func.func @transform_1(%arg0: i32) -> (i32, i32) {
    %c0_i32 = arith.constant 0 : i32
    %c0_i32_0 = arith.constant 0 : i32
    return %arg0, %c0_i32 : i32, i32
  }
  func.func @transform_2(%arg0: i32) -> (i32, i32) {
    %c0_i32 = arith.constant 0 : i32
    %c0_i32_0 = arith.constant 0 : i32
    return %arg0, %c0_i32 : i32, i32
  }
  func.func @transform_3(%arg0: i32) -> (i32, i32) {
    %c0_i32 = arith.constant 0 : i32
    %c0_i32_0 = arith.constant 0 : i32
    return %arg0, %c0_i32 : i32, i32
  }
}

</mosaic_0001>

<llo_original>
// kernel: tpu_custom_call.1
$region0: #{tpu_custom_call.1}
  #allocation0 [shape = 'u32[]', space=smem, size = 0x4, offset = 0x4, fixed_abs, tag = 'smem constant byte address 0x4 - core index']
  #allocation1 [shape = 'u32[144,128]{1,0:T(1,128)}', space=vmem, size = 0x12000, scoped, tag = 'internal scratch']
  %s0 = inlined_call_operand.vmem [shape: f32[8,128], index: 0, kind: input, shape index: {}]
  %s1 = inlined_call_operand.vmem [shape: s32[8,1], index: 1, kind: input, shape index: {}]
  %s2 = inlined_call_operand.vmem [shape: s32[8,1], index: 2, kind: input, shape index: {}]
  %s3 = inlined_call_operand.hbm [shape: f32[1,128], index: 3, kind: output, shape index: {}]
  %s4 = sld [smem:[#allocation0]]
  $region22: #{tpu_custom_call.1} parent=0
    _
  %s6 = ssub.s32 1, %s4
  %s7 = scalar_select 0, %s6, %s4
  $region1: #{tpu_custom_call.1} parent=0
    #allocation2 [shape = 'u8[512]{0}', space=vmem, size = 0x400, scoped, tag = 'output window, operand 0, single buffered']
    #allocation3 [shape = 's32[1]{0}', space=sflag, size = 0x4, scoped, tag = 'scoped memory for tpu_custom_call.1']
    %8 = vsyncpa [#allocation3], 0
    // Predicated region
    $region2: #{tpu_custom_call.1} parent=1 // pred_check
      _
    $region3: #{tpu_custom_call.1} parent=1 // pred_check_branch
      %10 = sbr.rel (0) target = $region5
    $region4: #{tpu_custom_call.1} parent=1 // pred_region
      _
    $region5: #{tpu_custom_call.1} parent=1 // pred_fallthru
      _
    // Predicated region
    $region6: #{tpu_custom_call.1} parent=1 // pred_check
      _
    $region7: #{tpu_custom_call.1} parent=1 // pred_check_branch
      %12 = sbr.rel (0) target = $region9
    $region8: #{tpu_custom_call.1} parent=1 // pred_region
      _
    $region9: #{tpu_custom_call.1} parent=1 // pred_fallthru
      _
    // Predicated region
    $region10: #{tpu_custom_call.1} parent=1 // pred_check
      _
    $region11: #{tpu_custom_call.1} parent=1 // pred_check_branch
      %14 = sbr.rel (0) target = $region13
    $region12: #{tpu_custom_call.1} parent=1 // pred_region
      _
    $region13: #{tpu_custom_call.1} parent=1 // pred_fallthru
      _
    %v15 = vld [vmem:[%s0] sm:$0xff]
    %v16 = vld [vmem:[%s1] sm:$0xff]
    %v17 = vld [vmem:[%s2] sm:$0xff]
    %18 = vmax.xlane.f32.xlu0 %v15
    %v19 = vpop.xlane.xlu0 %18
    %v20 = vsub.f32 %v15, %v19
    %v21 = vmul.f32 %v20, 1.442695
    %v22 = vpow.pop %v21
    %23 = vadd.xlane.f32.xlu0 %v22
    %v24 = vpop.xlane.xlu0 %23
    %v25 = vlaneseq
    %v26 = vand.u32 %v25, 127
    %27 = vset.pattern.permute.xlu0 0
    %28 = vperm.xlu0 %27, %v16
    %v29 = vpop.permute.xlu0 %28
    %vm30 = vcmp.eq.s32.totalorder %v26, %v29
    %v31 = vsel %vm30, %v15, 0.0
    %32 = vadd.xlane.f32.xlu0 %v31
    %v33 = vpop.xlane.xlu0 %32
    %v34 = vlog2.pop %v24
    %v35 = vmul.f32 %v34, 0.6931472
    %v36 = vadd.f32 %v19, %v35
    %v37 = vsub.f32 %v36, %v33
    %vm38 = vcmp.eq.s32.totalorder %v17, 1
    %vm39 = vcmp.eq.s32.totalorder %v17, 0
    %v40 = vsel %vm38, %v37, 0.0
    %vm41 = vcmask 7168
    %v42 = vsel %vm41, %v40, 0.0
    %43 = vadd.xlane.f32.xlu0 %v42
    %v44 = vpop.xlane.xlu0 %43
    %v45 = vrot.slane %v44, 4
    %v46 = vadd.f32 %v44, %v45
    %v47 = vrot.slane %v46, 2
    %v48 = vadd.f32 %v46, %v47
    %v49 = vrot.slane %v48, 1
    %v50 = vadd.f32 %v48, %v49
    %s51 = vtos %v50
    %vm52 = vcmp.ge.f32.partialorder %v37, 0.51282364
    %v53 = vsel %vm52, 0.0, %v37
    %v54 = vsel %vm39, %v53, 0.0
    %v55 = vsel %vm41, %v54, 0.0
    %56 = vadd.xlane.f32.xlu0 %v55
    %v57 = vpop.xlane.xlu0 %56
    %v58 = vrot.slane %v57, 4
    %v59 = vadd.f32 %v57, %v58
    %v60 = vrot.slane %v59, 2
    %v61 = vadd.f32 %v59, %v60
    %v62 = vrot.slane %v61, 1
    %v63 = vadd.f32 %v61, %v62
    %s64 = vtos %v63
    %vm65 = vcmp.eq.s32.totalorder %v26, 0
    %vm66 = vcmp.eq.s32.totalorder %v26, 1
    %v67 = vstv %s64
    %v68 = vsel %vm66, %v67, 0.0
    %v69 = vstv %s51
    %v70 = vsel %vm65, %v69, %v68
    %71 = vst [vmem:[#allocation2] sm:$0x1] %v70
    // Predicated region
    $region14: #{tpu_custom_call.1} parent=1 // pred_check
      _
    $region15: #{tpu_custom_call.1} parent=1 // pred_check_branch
      %73 = sbr.rel (0) target = $region17
    $region16: #{tpu_custom_call.1} parent=1 // pred_region
      %s75 = ssub.s32 16, 16
      %76 = vsyncadd [#allocation3], %s75
      %s78 = sshll.u32 [#allocation2], 4
      %s79 = int_to_ptr.vmem [resolvable:$true] %s78
      %81 = dma.vmem_to_hbm [thread:$0]  %s79, 16, %s3, [#allocation3]
    $region17: #{tpu_custom_call.1} parent=1 // pred_fallthru
      _
    // Predicated region
    $region18: #{tpu_custom_call.1} parent=1 // pred_check
      _
    $region19: #{tpu_custom_call.1} parent=1 // pred_check_branch
      %83 = sbr.rel (0) target = $region21
    $region20: #{tpu_custom_call.1} parent=1 // pred_region
      %84 = dma.done [#allocation3], 16
    $region21: #{tpu_custom_call.1} parent=1 // pred_fallthru
      _
    %85 = vsyncpa [#allocation3], 1

</llo_original>
